<compile_context>
chip_gen: v7x
topology: tpu7x:2x2x1
jax: 0.10.0
libtpu: 0.0.40
codegen_flags: <defaults>
</compile_context>

<pallas_src>
import math

import jax
import jax.numpy as jnp
from jax import lax
from jax.experimental import pallas as pl
from jax.experimental.pallas import tpu as pltpu

OTHER_TENSOR = 1.0  # the python scalar `other_tensor = 1` in the module


def _linear_add_kernel(x_ref, w_ref, b_ref, o_ref):
    # x_ref: (tile_n, in_f)   w_ref: (out_f, in_f)   b_ref: (1, out_f)
    # o_ref: (tile_n, out_f)
    acc = lax.dot_general(
        x_ref[...], w_ref[...],
        dimension_numbers=(((1,), (1,)), ((), ())),   # x @ W^T without moving W
        preferred_element_type=jnp.float32)
    o_ref[...] = (acc + b_ref[...]).astype(o_ref.dtype)


def linear_plus_scalar(x, weight, bias, other=OTHER_TENSOR, max_tile_n=8192):
    """x: (..., in_features); weight: (out, in) [PyTorch layout]; bias: (out,)."""
    out_f, in_f = weight.shape
    orig_shape = x.shape
    assert orig_shape[-1] == in_f, (orig_shape, weight.shape)
    n = math.prod(orig_shape[:-1])

    # Natural layout: flatten leading dims only (no copy, no transpose).
    x2d = x.reshape(n, in_f)

    # Fold the python scalar into the bias (one broadcast add in-kernel).
    b_row = (bias.astype(jnp.float32) + jnp.float32(other)).reshape(1, out_f)

    # Guard the tile row-count: keep it 128-aligned (>= sublane multiple of 8).
    max_tile_n = max(128, (int(max_tile_n) // 128) * 128)

    cost = pl.CostEstimate(
        flops=2 * n * in_f * out_f,
        transcendentals=0,
        bytes_accessed=(n * in_f + n * out_f + out_f * in_f + out_f) * 4)

    if n <= max_tile_n:
        # Tiny problem: full-array VMEM blocks, no grid, no pipeline overhead.
        out2d = pl.pallas_call(
            _linear_add_kernel,
            out_shape=jax.ShapeDtypeStruct((n, out_f), x.dtype),
            in_specs=[
                pl.BlockSpec(memory_space=pltpu.MemorySpace.VMEM),
                pl.BlockSpec(memory_space=pltpu.MemorySpace.VMEM),
                pl.BlockSpec(memory_space=pltpu.MemorySpace.VMEM),
            ],
            out_specs=pl.BlockSpec(memory_space=pltpu.MemorySpace.VMEM),
            cost_estimate=cost,
        )(x2d, weight, b_row)
    else:
        tile_n = max_tile_n
        num_tiles = pl.cdiv(n, tile_n)  # ragged last block is masked by Pallas
        out2d = pl.pallas_call(
            _linear_add_kernel,
            out_shape=jax.ShapeDtypeStruct((n, out_f), x.dtype),
            grid=(num_tiles,),
            in_specs=[
                pl.BlockSpec((tile_n, in_f), lambda i: (i, 0)),
                pl.BlockSpec((out_f, in_f), lambda i: (0, 0)),   # W resident
                pl.BlockSpec((1, out_f), lambda i: (0, 0)),      # bias resident
            ],
            out_specs=pl.BlockSpec((tile_n, out_f), lambda i: (i, 0)),
            compiler_params=pltpu.CompilerParams(
                dimension_semantics=("parallel",)),
            cost_estimate=cost,
        )(x2d, weight, b_row)

    return out2d.reshape(*orig_shape[:-1], out_f)


if __name__ == "__main__":
    IN_FEATURES = 8
    OUT_FEATURES = 16

    key = jax.random.PRNGKey(0)
    kw, kb, kx1, kx2, kx3 = jax.random.split(key, 5)

    # Deterministic parameter init (PyTorch default: U(-1/sqrt(in), 1/sqrt(in))).
    bound = 1.0 / (IN_FEATURES ** 0.5)
    weight = jax.random.uniform(
        kw, (OUT_FEATURES, IN_FEATURES), minval=-bound, maxval=bound,
        dtype=jnp.float32)
    bias = jax.random.uniform(
        kb, (OUT_FEATURES,), minval=-bound, maxval=bound, dtype=jnp.float32)

    # Case 1: shape mirroring the module's x2 with last dim = in_features
    # (Linear(8,16) requires the contracted dim to be 8). Single-block path.
    x1 = jax.random.normal(kx1, (1, 8, 64, IN_FEATURES), dtype=jnp.float32)
    out1 = jax.block_until_ready(linear_plus_scalar(x1, weight, bias))
    ref1 = jnp.einsum("bchi,oi->bcho", x1, weight) + bias + OTHER_TENSOR
    assert out1.shape == (1, 8, 64, OUT_FEATURES), out1.shape
    assert jnp.allclose(out1, ref1, atol=1e-5), "mismatch (single block)"

    # Case 2: small max_tile_n to exercise the tiled/grid ("parallel") path.
    x2 = jax.random.normal(kx2, (1, 8, 64, IN_FEATURES), dtype=jnp.float32)
    out2 = jax.block_until_ready(
        linear_plus_scalar(x2, weight, bias, max_tile_n=128))
    ref2 = jnp.einsum("bchi,oi->bcho", x2, weight) + bias + OTHER_TENSOR
    assert out2.shape == (1, 8, 64, OUT_FEATURES), out2.shape
    assert jnp.allclose(out2, ref2, atol=1e-5), "mismatch (tiled)"

    # Case 3: ragged row count (n = 520 not a multiple of tile_n=128) to
    # exercise the masked last block (no host-side padding).
    x3 = jax.random.normal(kx3, (1, 8, 65, IN_FEATURES), dtype=jnp.float32)
    out3 = jax.block_until_ready(
        linear_plus_scalar(x3, weight, bias, max_tile_n=128))
    ref3 = jnp.einsum("bchi,oi->bcho", x3, weight) + bias + OTHER_TENSOR
    assert out3.shape == (1, 8, 65, OUT_FEATURES), out3.shape
    assert jnp.allclose(out3, ref3, atol=1e-5), "mismatch (ragged tiled)"

    print("KERNEL_OK")
</pallas_src>

<mosaic_0001>
module attributes {stable_mosaic.version = 11 : i64} {
  func.func @_linear_add_kernel(%arg0: memref<512x8xf32, #tpu.memory_space<vmem>>, %arg1: memref<16x8xf32, #tpu.memory_space<vmem>>, %arg2: memref<1x16xf32, #tpu.memory_space<vmem>>, %arg3: memref<512x16xf32, #tpu.memory_space<vmem>>) attributes {dimension_semantics = [], scalar_prefetch = 0 : i64, scratch_operands = 0 : i64, tpu.core_type = #tpu.core_type<tc>} {
    %c0 = arith.constant 0 : index
    %c0_0 = arith.constant 0 : index
    %0 = vector.load %arg0[%c0, %c0_0] : memref<512x8xf32, #tpu.memory_space<vmem>>, vector<512x8xf32>
    %c0_1 = arith.constant 0 : index
    %c0_2 = arith.constant 0 : index
    %1 = vector.load %arg1[%c0_1, %c0_2] : memref<16x8xf32, #tpu.memory_space<vmem>>, vector<16x8xf32>
    %cst = arith.constant dense<0.000000e+00> : vector<512x16xf32>
    %2 = tpu.matmul %0, %1, %cst {dimension_numbers = #tpu.dot_dimension_numbers<[1], [1], [0], [0], [0, 0, 1, 0], [], []>} : vector<512x8xf32>, vector<16x8xf32>, vector<512x16xf32> -> vector<512x16xf32>
    %c0_3 = arith.constant 0 : index
    %c0_4 = arith.constant 0 : index
    %3 = vector.load %arg2[%c0_3, %c0_4] : memref<1x16xf32, #tpu.memory_space<vmem>>, vector<1x16xf32>
    %4 = vector.broadcast %3 : vector<1x16xf32> to vector<512x16xf32>
    %5 = arith.addf %2, %4 : vector<512x16xf32>
    %c0_5 = arith.constant 0 : index
    %c0_6 = arith.constant 0 : index
    %6 = vector.load %arg3[%c0_5, %c0_6] : memref<512x16xf32, #tpu.memory_space<vmem>>, vector<512x16xf32>
    tpu.vector_store %arg3[%c0_5, %c0_6], %5 {strides = array<i32>} : memref<512x16xf32, #tpu.memory_space<vmem>>, vector<512x16xf32>,
    return
  }
}

</mosaic_0001>

<llo_original>
// kernel: tpu_custom_call.1
$region0: #{tpu_custom_call.1}
  #allocation0 [shape = 'u32[]', space=smem, size = 0x4, offset = 0x4, fixed_abs, tag = 'smem constant byte address 0x4 - core index']
  #allocation1 [shape = 'u32[144,128]{1,0:T(1,128)}', space=vmem, size = 0x12000, scoped, tag = 'internal scratch']
  %s0 = inlined_call_operand.vmem [shape: f32[512,8], index: 0, kind: input, shape index: {}]
  %s1 = inlined_call_operand.vmem [shape: f32[16,8], index: 1, kind: input, shape index: {}]
  %s2 = inlined_call_operand.vmem [shape: f32[1,16], index: 2, kind: input, shape index: {}]
  %s3 = inlined_call_operand.vmem [shape: f32[512,16], index: 3, kind: output, shape index: {}]
  %s4 = sld [smem:[#allocation0]]
  $region22: #{tpu_custom_call.1} parent=0
    _
  %s6 = ssub.s32 1, %s4
  %s7 = scalar_select 0, %s6, %s4
  // Predicated region
  $region2: #{tpu_custom_call.1} parent=0 // pred_check
    _
  $region3: #{tpu_custom_call.1} parent=0 // pred_check_branch
    %9 = sbr.rel (0) target = $region5
  $region4: #{tpu_custom_call.1} parent=0 // pred_region
    _
  $region5: #{tpu_custom_call.1} parent=0 // pred_fallthru
    _
  // Predicated region
  $region6: #{tpu_custom_call.1} parent=0 // pred_check
    _
  $region7: #{tpu_custom_call.1} parent=0 // pred_check_branch
    %11 = sbr.rel (0) target = $region9
  $region8: #{tpu_custom_call.1} parent=0 // pred_region
    _
  $region9: #{tpu_custom_call.1} parent=0 // pred_fallthru
    _
  // Predicated region
  $region10: #{tpu_custom_call.1} parent=0 // pred_check
    _
  $region11: #{tpu_custom_call.1} parent=0 // pred_check_branch
    %13 = sbr.rel (0) target = $region13
  $region12: #{tpu_custom_call.1} parent=0 // pred_region
    _
  $region13: #{tpu_custom_call.1} parent=0 // pred_fallthru
    _
  %v14 = vld [vmem:[%s0] sm:$0xff]
  %v15 = vld [vmem:[%s0 + $0x8] sm:$0xff]
  %v16 = vld [vmem:[%s0 + $0x10] sm:$0xff]
  %v17 = vld [vmem:[%s0 + $0x18] sm:$0xff]
  %v18 = vld [vmem:[%s0 + $0x20] sm:$0xff]
  %v19 = vld [vmem:[%s0 + $0x28] sm:$0xff]
  %v20 = vld [vmem:[%s0 + $0x30] sm:$0xff]
  %v21 = vld [vmem:[%s0 + $0x38] sm:$0xff]
  %v22 = vld [vmem:[%s0 + $0x40] sm:$0xff]
  %v23 = vld [vmem:[%s0 + $0x48] sm:$0xff]
  %v24 = vld [vmem:[%s0 + $0x50] sm:$0xff]
  %v25 = vld [vmem:[%s0 + $0x58] sm:$0xff]
  %v26 = vld [vmem:[%s0 + $0x60] sm:$0xff]
  %v27 = vld [vmem:[%s0 + $0x68] sm:$0xff]
  %v28 = vld [vmem:[%s0 + $0x70] sm:$0xff]
  %v29 = vld [vmem:[%s0 + $0x78] sm:$0xff]
  %v30 = vld [vmem:[%s0 + $0x80] sm:$0xff]
  %v31 = vld [vmem:[%s0 + $0x88] sm:$0xff]
  %v32 = vld [vmem:[%s0 + $0x90] sm:$0xff]
  %v33 = vld [vmem:[%s0 + $0x98] sm:$0xff]
  %v34 = vld [vmem:[%s0 + $0xa0] sm:$0xff]
  %v35 = vld [vmem:[%s0 + $0xa8] sm:$0xff]
  %v36 = vld [vmem:[%s0 + $0xb0] sm:$0xff]
  %v37 = vld [vmem:[%s0 + $0xb8] sm:$0xff]
  %v38 = vld [vmem:[%s0 + $0xc0] sm:$0xff]
  %v39 = vld [vmem:[%s0 + $0xc8] sm:$0xff]
  %v40 = vld [vmem:[%s0 + $0xd0] sm:$0xff]
  %v41 = vld [vmem:[%s0 + $0xd8] sm:$0xff]
  %v42 = vld [vmem:[%s0 + $0xe0] sm:$0xff]
  %v43 = vld [vmem:[%s0 + $0xe8] sm:$0xff]
  %v44 = vld [vmem:[%s0 + $0xf0] sm:$0xff]
  %v45 = vld [vmem:[%s0 + $0xf8] sm:$0xff]
  %v46 = vld [vmem:[%s0 + $0x100] sm:$0xff]
  %v47 = vld [vmem:[%s0 + $0x108] sm:$0xff]
  %v48 = vld [vmem:[%s0 + $0x110] sm:$0xff]
  %v49 = vld [vmem:[%s0 + $0x118] sm:$0xff]
  %v50 = vld [vmem:[%s0 + $0x120] sm:$0xff]
  %v51 = vld [vmem:[%s0 + $0x128] sm:$0xff]
  %v52 = vld [vmem:[%s0 + $0x130] sm:$0xff]
  %v53 = vld [vmem:[%s0 + $0x138] sm:$0xff]
  %v54 = vld [vmem:[%s0 + $0x140] sm:$0xff]
  %v55 = vld [vmem:[%s0 + $0x148] sm:$0xff]
  %v56 = vld [vmem:[%s0 + $0x150] sm:$0xff]
  %v57 = vld [vmem:[%s0 + $0x158] sm:$0xff]
  %v58 = vld [vmem:[%s0 + $0x160] sm:$0xff]
  %v59 = vld [vmem:[%s0 + $0x168] sm:$0xff]
  %v60 = vld [vmem:[%s0 + $0x170] sm:$0xff]
  %v61 = vld [vmem:[%s0 + $0x178] sm:$0xff]
  %v62 = vld [vmem:[%s0 + $0x180] sm:$0xff]
  %v63 = vld [vmem:[%s0 + $0x188] sm:$0xff]
  %v64 = vld [vmem:[%s0 + $0x190] sm:$0xff]
  %v65 = vld [vmem:[%s0 + $0x198] sm:$0xff]
  %v66 = vld [vmem:[%s0 + $0x1a0] sm:$0xff]
  %v67 = vld [vmem:[%s0 + $0x1a8] sm:$0xff]
  %v68 = vld [vmem:[%s0 + $0x1b0] sm:$0xff]
  %v69 = vld [vmem:[%s0 + $0x1b8] sm:$0xff]
  %v70 = vld [vmem:[%s0 + $0x1c0] sm:$0xff]
  %v71 = vld [vmem:[%s0 + $0x1c8] sm:$0xff]
  %v72 = vld [vmem:[%s0 + $0x1d0] sm:$0xff]
  %v73 = vld [vmem:[%s0 + $0x1d8] sm:$0xff]
  %v74 = vld [vmem:[%s0 + $0x1e0] sm:$0xff]
  %v75 = vld [vmem:[%s0 + $0x1e8] sm:$0xff]
  %v76 = vld [vmem:[%s0 + $0x1f0] sm:$0xff]
  %v77 = vld [vmem:[%s0 + $0x1f8] sm:$0xff]
  %v78 = vld [vmem:[%s1] sm:$0xff]
  %v79 = vld [vmem:[%s1 + $0x8] sm:$0xff]
  %v80 = vld [vmem:[%s2] sm:$0x1]
  %v82 = vlaneseq
  %v83 = vshrl.u32 %v82, 7
  %v84 = vsub.s32 0, %v83
  %v85 = vrot.slane %v80, %v84
  %vm87 = vcmask 64512
  %v89 = vsel %vm87, %v14, 0
  %v92 = vsel %vm87, %v15, 0
  %v95 = vsel %vm87, %v16, 0
  %v98 = vsel %vm87, %v17, 0
  %v101 = vsel %vm87, %v18, 0
  %v104 = vsel %vm87, %v19, 0
  %v107 = vsel %vm87, %v20, 0
  %v110 = vsel %vm87, %v21, 0
  %v113 = vsel %vm87, %v22, 0
  %v116 = vsel %vm87, %v23, 0
  %v119 = vsel %vm87, %v24, 0
  %v122 = vsel %vm87, %v25, 0
  %v125 = vsel %vm87, %v26, 0
  %v128 = vsel %vm87, %v27, 0
  %v131 = vsel %vm87, %v28, 0
  %v134 = vsel %vm87, %v29, 0
  %v137 = vsel %vm87, %v30, 0
  %v140 = vsel %vm87, %v31, 0
  %v143 = vsel %vm87, %v32, 0
  %v146 = vsel %vm87, %v33, 0
  %v149 = vsel %vm87, %v34, 0
  %v152 = vsel %vm87, %v35, 0
  %v155 = vsel %vm87, %v36, 0
  %v158 = vsel %vm87, %v37, 0
  %v161 = vsel %vm87, %v38, 0
  %v164 = vsel %vm87, %v39, 0
  %v167 = vsel %vm87, %v40, 0
  %v170 = vsel %vm87, %v41, 0
  %v173 = vsel %vm87, %v42, 0
  %v176 = vsel %vm87, %v43, 0
  %v179 = vsel %vm87, %v44, 0
  %v182 = vsel %vm87, %v45, 0
  %v185 = vsel %vm87, %v46, 0
  %v188 = vsel %vm87, %v47, 0
  %v191 = vsel %vm87, %v48, 0
  %v194 = vsel %vm87, %v49, 0
  %v197 = vsel %vm87, %v50, 0
  %v200 = vsel %vm87, %v51, 0
  %v203 = vsel %vm87, %v52, 0
  %v206 = vsel %vm87, %v53, 0
  %v209 = vsel %vm87, %v54, 0
  %v212 = vsel %vm87, %v55, 0
  %v215 = vsel %vm87, %v56, 0
  %v218 = vsel %vm87, %v57, 0
  %v221 = vsel %vm87, %v58, 0
  %v224 = vsel %vm87, %v59, 0
  %v227 = vsel %vm87, %v60, 0
  %v230 = vsel %vm87, %v61, 0
  %v233 = vsel %vm87, %v62, 0
  %v236 = vsel %vm87, %v63, 0
  %v239 = vsel %vm87, %v64, 0
  %v242 = vsel %vm87, %v65, 0
  %v245 = vsel %vm87, %v66, 0
  %v248 = vsel %vm87, %v67, 0
  %v251 = vsel %vm87, %v68, 0
  %v254 = vsel %vm87, %v69, 0
  %v257 = vsel %vm87, %v70, 0
  %v260 = vsel %vm87, %v71, 0
  %v263 = vsel %vm87, %v72, 0
  %v266 = vsel %vm87, %v73, 0
  %v269 = vsel %vm87, %v74, 0
  %v272 = vsel %vm87, %v75, 0
  %v275 = vsel %vm87, %v76, 0
  %v278 = vsel %vm87, %v77, 0
  %v281 = vsel %vm87, %v78, 0
  %v284 = vsel %vm87, %v79, 0
  %286 = vmatprep.subr.mxu0 0.0
  %287 = vmatpush1.xpose.msra.mxu0 %v281
  %288 = vmatprep.subr.mxu0 0.0
  %289 = vmatpush1.xpose.msra.mxu0 %v284
  %290 = vmatprep.subr.mxu0 0.0
  %291 = vmatpush1.xpose.msra.mxu0 0.0
  %292 = vmatprep.subr.mxu0 0.0
  %293 = vmatpush1.xpose.msra.mxu0 0.0
  %294 = vmatprep.subr.mxu0 0.0
  %295 = vmatpush1.xpose.msra.mxu0 0.0
  %296 = vmatprep.subr.mxu0 0.0
  %297 = vmatpush1.xpose.msra.mxu0 0.0
  %298 = vmatprep.subr.mxu0 0.0
  %299 = vmatpush1.xpose.msra.mxu0 0.0
  %300 = vmatprep.subr.mxu0 0.0
  %301 = vmatpush1.xpose.msra.mxu0 0.0
  %302 = vmatprep.subr.mxu0 0.0
  %303 = vmatpush1.xpose.msra.mxu0 0.0
  %304 = vmatprep.subr.mxu0 0.0
  %305 = vmatpush1.xpose.msra.mxu0 0.0
  %306 = vmatprep.subr.mxu0 0.0
  %307 = vmatpush1.xpose.msra.mxu0 0.0
  %308 = vmatprep.subr.mxu0 0.0
  %309 = vmatpush1.xpose.msra.mxu0 0.0
  %310 = vmatprep.subr.mxu0 0.0
  %311 = vmatpush1.xpose.msra.mxu0 0.0
  %312 = vmatprep.subr.mxu0 0.0
  %313 = vmatpush1.xpose.msra.mxu0 0.0
  %314 = vmatprep.subr.mxu0 0.0
  %315 = vmatpush1.xpose.msra.mxu0 0.0
  %316 = vmatprep.subr.mxu0 0.0
  %317 = vmatpush1.xpose.msra.mxu0 0.0
  %318 = vmatprep.subr.mxu0 0.0
  %319 = vmatpush1.xpose.msra.mxu0 0.0
  %320 = vmatprep.subr.mxu0 0.0
  %321 = vmatpush1.xpose.msra.mxu0 0.0
  %322 = vmatprep.subr.mxu0 0.0
  %323 = vmatpush1.xpose.msra.mxu0 0.0
  %324 = vmatprep.subr.mxu0 0.0
  %325 = vmatpush1.xpose.msra.mxu0 0.0
  %326 = vmatprep.subr.mxu0 0.0
  %327 = vmatpush1.xpose.msra.mxu0 0.0
  %328 = vmatprep.subr.mxu0 0.0
  %329 = vmatpush1.xpose.msra.mxu0 0.0
  %330 = vmatprep.subr.mxu0 0.0
  %331 = vmatpush1.xpose.msra.mxu0 0.0
  %332 = vmatprep.subr.mxu0 0.0
  %333 = vmatpush1.xpose.msra.mxu0 0.0
  %334 = vmatprep.subr.mxu0 0.0
  %335 = vmatpush1.xpose.msra.mxu0 0.0
  %336 = vmatprep.subr.mxu0 0.0
  %337 = vmatpush1.xpose.msra.mxu0 0.0
  %338 = vmatprep.subr.mxu0 0.0
  %339 = vmatpush1.xpose.msra.mxu0 0.0
  %340 = vmatprep.subr.mxu0 0.0
  %341 = vmatpush1.xpose.msra.mxu0 0.0
  %342 = vmatprep.subr.mxu0 0.0
  %343 = vmatpush1.xpose.msra.mxu0 0.0
  %344 = vmatprep.subr.mxu0 0.0
  %345 = vmatpush1.xpose.msra.mxu0 0.0
  %346 = vmatprep.subr.mxu0 0.0
  %347 = vmatpush1.xpose.msra.mxu0 0.0
  %348 = vmatprep.subr.mxu0 0.0
  %349 = vmatpush1.xpose.msra.mxu0 0.0
  %350 = vmatprep.mubr.f32.mxu0 0.0
  %351 = vmatmul.mubr.f32.gmra.mrb[0].mxu0 %v89
  %v352 = vpop.f32.mrb[0].mxu0
  %v353 = vadd.f32 %v85, %v352
  %v354 = vpop.f32.mrb[0].mxu0
  %355 = vmatprep.mubr.f32.mxu0 0.0
  %356 = vmatmul.mubr.f32.gmra.mrb[0].mxu0 %v92
  %v357 = vpop.f32.mrb[0].mxu0
  %v358 = vadd.f32 %v85, %v357
  %v359 = vpop.f32.mrb[0].mxu0
  %360 = vmatprep.mubr.f32.mxu0 0.0
  %361 = vmatmul.mubr.f32.gmra.mrb[0].mxu0 %v95
  %v362 = vpop.f32.mrb[0].mxu0
  %v363 = vadd.f32 %v85, %v362
  %v364 = vpop.f32.mrb[0].mxu0
  %365 = vmatprep.mubr.f32.mxu0 0.0
  %366 = vmatmul.mubr.f32.gmra.mrb[0].mxu0 %v98
  %v367 = vpop.f32.mrb[0].mxu0
  %v368 = vadd.f32 %v85, %v367
  %v369 = vpop.f32.mrb[0].mxu0
  %370 = vmatprep.mubr.f32.mxu0 0.0
  %371 = vmatmul.mubr.f32.gmra.mrb[0].mxu0 %v101
  %v372 = vpop.f32.mrb[0].mxu0
  %v373 = vadd.f32 %v85, %v372
  %v374 = vpop.f32.mrb[0].mxu0
  %375 = vmatprep.mubr.f32.mxu0 0.0
  %376 = vmatmul.mubr.f32.gmra.mrb[0].mxu0 %v104
  %v377 = vpop.f32.mrb[0].mxu0
  %v378 = vadd.f32 %v85, %v377
  %v379 = vpop.f32.mrb[0].mxu0
  %380 = vmatprep.mubr.f32.mxu0 0.0
  %381 = vmatmul.mubr.f32.gmra.mrb[0].mxu0 %v107
  %v382 = vpop.f32.mrb[0].mxu0
  %v383 = vadd.f32 %v85, %v382
  %v384 = vpop.f32.mrb[0].mxu0
  %385 = vmatprep.mubr.f32.mxu0 0.0
  %386 = vmatmul.mubr.f32.gmra.mrb[0].mxu0 %v110
  %v387 = vpop.f32.mrb[0].mxu0
  %v388 = vadd.f32 %v85, %v387
  %v389 = vpop.f32.mrb[0].mxu0
  %390 = vmatprep.mubr.f32.mxu0 0.0
  %391 = vmatmul.mubr.f32.gmra.mrb[0].mxu0 %v113
  %v392 = vpop.f32.mrb[0].mxu0
  %v393 = vadd.f32 %v85, %v392
  %v394 = vpop.f32.mrb[0].mxu0
  %395 = vmatprep.mubr.f32.mxu0 0.0
  %396 = vmatmul.mubr.f32.gmra.mrb[0].mxu0 %v116
  %v397 = vpop.f32.mrb[0].mxu0
  %v398 = vadd.f32 %v85, %v397
  %v399 = vpop.f32.mrb[0].mxu0
  %400 = vmatprep.mubr.f32.mxu0 0.0
  %401 = vmatmul.mubr.f32.gmra.mrb[0].mxu0 %v119
  %v402 = vpop.f32.mrb[0].mxu0
  %v403 = vadd.f32 %v85, %v402
  %v404 = vpop.f32.mrb[0].mxu0
  %405 = vmatprep.mubr.f32.mxu0 0.0
  %406 = vmatmul.mubr.f32.gmra.mrb[0].mxu0 %v122
  %v407 = vpop.f32.mrb[0].mxu0
  %v408 = vadd.f32 %v85, %v407
  %v409 = vpop.f32.mrb[0].mxu0
  %410 = vmatprep.mubr.f32.mxu0 0.0
  %411 = vmatmul.mubr.f32.gmra.mrb[0].mxu0 %v125
  %v412 = vpop.f32.mrb[0].mxu0
  %v413 = vadd.f32 %v85, %v412
  %v414 = vpop.f32.mrb[0].mxu0
  %415 = vmatprep.mubr.f32.mxu0 0.0
  %416 = vmatmul.mubr.f32.gmra.mrb[0].mxu0 %v128
  %v417 = vpop.f32.mrb[0].mxu0
  %v418 = vadd.f32 %v85, %v417
  %v419 = vpop.f32.mrb[0].mxu0
  %420 = vmatprep.mubr.f32.mxu0 0.0
  %421 = vmatmul.mubr.f32.gmra.mrb[0].mxu0 %v131
  %v422 = vpop.f32.mrb[0].mxu0
  %v423 = vadd.f32 %v85, %v422
  %v424 = vpop.f32.mrb[0].mxu0
  %425 = vmatprep.mubr.f32.mxu0 0.0
  %426 = vmatmul.mubr.f32.gmra.mrb[0].mxu0 %v134
  %v427 = vpop.f32.mrb[0].mxu0
  %v428 = vadd.f32 %v85, %v427
  %v429 = vpop.f32.mrb[0].mxu0
  %430 = vmatprep.mubr.f32.mxu0 0.0
  %431 = vmatmul.mubr.f32.gmra.mrb[0].mxu0 %v137
  %v432 = vpop.f32.mrb[0].mxu0
  %v433 = vadd.f32 %v85, %v432
  %v434 = vpop.f32.mrb[0].mxu0
  %435 = vmatprep.mubr.f32.mxu0 0.0
  %436 = vmatmul.mubr.f32.gmra.mrb[0].mxu0 %v140
  %v437 = vpop.f32.mrb[0].mxu0
  %v438 = vadd.f32 %v85, %v437
  %v439 = vpop.f32.mrb[0].mxu0
  %440 = vmatprep.mubr.f32.mxu0 0.0
  %441 = vmatmul.mubr.f32.gmra.mrb[0].mxu0 %v143
  %v442 = vpop.f32.mrb[0].mxu0
  %v443 = vadd.f32 %v85, %v442
  %v444 = vpop.f32.mrb[0].mxu0
  %445 = vmatprep.mubr.f32.mxu0 0.0
  %446 = vmatmul.mubr.f32.gmra.mrb[0].mxu0 %v146
  %v447 = vpop.f32.mrb[0].mxu0
  %v448 = vadd.f32 %v85, %v447
  %v449 = vpop.f32.mrb[0].mxu0
  %450 = vmatprep.mubr.f32.mxu0 0.0
  %451 = vmatmul.mubr.f32.gmra.mrb[0].mxu0 %v149
  %v452 = vpop.f32.mrb[0].mxu0
  %v453 = vadd.f32 %v85, %v452
  %v454 = vpop.f32.mrb[0].mxu0
  %455 = vmatprep.mubr.f32.mxu0 0.0
  %456 = vmatmul.mubr.f32.gmra.mrb[0].mxu0 %v152
  %v457 = vpop.f32.mrb[0].mxu0
  %v458 = vadd.f32 %v85, %v457
  %v459 = vpop.f32.mrb[0].mxu0
  %460 = vmatprep.mubr.f32.mxu0 0.0
  %461 = vmatmul.mubr.f32.gmra.mrb[0].mxu0 %v155
  %v462 = vpop.f32.mrb[0].mxu0
  %v463 = vadd.f32 %v85, %v462
  %v464 = vpop.f32.mrb[0].mxu0
  %465 = vmatprep.mubr.f32.mxu0 0.0
  %466 = vmatmul.mubr.f32.gmra.mrb[0].mxu0 %v158
  %v467 = vpop.f32.mrb[0].mxu0
  %v468 = vadd.f32 %v85, %v467
  %v469 = vpop.f32.mrb[0].mxu0
  %470 = vmatprep.mubr.f32.mxu0 0.0
  %471 = vmatmul.mubr.f32.gmra.mrb[0].mxu0 %v161
  %v472 = vpop.f32.mrb[0].mxu0
  %v473 = vadd.f32 %v85, %v472
  %v474 = vpop.f32.mrb[0].mxu0
  %475 = vmatprep.mubr.f32.mxu0 0.0
  %476 = vmatmul.mubr.f32.gmra.mrb[0].mxu0 %v164
  %v477 = vpop.f32.mrb[0].mxu0
  %v478 = vadd.f32 %v85, %v477
  %v479 = vpop.f32.mrb[0].mxu0
  %480 = vmatprep.mubr.f32.mxu0 0.0
  %481 = vmatmul.mubr.f32.gmra.mrb[0].mxu0 %v167
  %v482 = vpop.f32.mrb[0].mxu0
  %v483 = vadd.f32 %v85, %v482
  %v484 = vpop.f32.mrb[0].mxu0
  %485 = vmatprep.mubr.f32.mxu0 0.0
  %486 = vmatmul.mubr.f32.gmra.mrb[0].mxu0 %v170
  %v487 = vpop.f32.mrb[0].mxu0
  %v488 = vadd.f32 %v85, %v487
  %v489 = vpop.f32.mrb[0].mxu0
  %490 = vmatprep.mubr.f32.mxu0 0.0
  %491 = vmatmul.mubr.f32.gmra.mrb[0].mxu0 %v173
  %v492 = vpop.f32.mrb[0].mxu0
  %v493 = vadd.f32 %v85, %v492
  %v494 = vpop.f32.mrb[0].mxu0
  %495 = vmatprep.mubr.f32.mxu0 0.0
  %496 = vmatmul.mubr.f32.gmra.mrb[0].mxu0 %v176
  %v497 = vpop.f32.mrb[0].mxu0
  %v498 = vadd.f32 %v85, %v497
  %v499 = vpop.f32.mrb[0].mxu0
  %500 = vmatprep.mubr.f32.mxu0 0.0
  %501 = vmatmul.mubr.f32.gmra.mrb[0].mxu0 %v179
  %v502 = vpop.f32.mrb[0].mxu0
  %v503 = vadd.f32 %v85, %v502
  %v504 = vpop.f32.mrb[0].mxu0
  %505 = vmatprep.mubr.f32.mxu0 0.0
  %506 = vmatmul.mubr.f32.gmra.mrb[0].mxu0 %v182
  %v507 = vpop.f32.mrb[0].mxu0
  %v508 = vadd.f32 %v85, %v507
  %v509 = vpop.f32.mrb[0].mxu0
  %510 = vmatprep.mubr.f32.mxu0 0.0
  %511 = vmatmul.mubr.f32.gmra.mrb[0].mxu0 %v185
  %v512 = vpop.f32.mrb[0].mxu0
  %v513 = vadd.f32 %v85, %v512
  %v514 = vpop.f32.mrb[0].mxu0
  %515 = vmatprep.mubr.f32.mxu0 0.0
  %516 = vmatmul.mubr.f32.gmra.mrb[0].mxu0 %v188
  %v517 = vpop.f32.mrb[0].mxu0
  %v518 = vadd.f32 %v85, %v517
  %v519 = vpop.f32.mrb[0].mxu0
  %520 = vmatprep.mubr.f32.mxu0 0.0
  %521 = vmatmul.mubr.f32.gmra.mrb[0].mxu0 %v191
  %v522 = vpop.f32.mrb[0].mxu0
  %v523 = vadd.f32 %v85, %v522
  %v524 = vpop.f32.mrb[0].mxu0
  %525 = vmatprep.mubr.f32.mxu0 0.0
  %526 = vmatmul.mubr.f32.gmra.mrb[0].mxu0 %v194
  %v527 = vpop.f32.mrb[0].mxu0
  %v528 = vadd.f32 %v85, %v527
  %v529 = vpop.f32.mrb[0].mxu0
  %530 = vmatprep.mubr.f32.mxu0 0.0
  %531 = vmatmul.mubr.f32.gmra.mrb[0].mxu0 %v197
  %v532 = vpop.f32.mrb[0].mxu0
  %v533 = vadd.f32 %v85, %v532
  %v534 = vpop.f32.mrb[0].mxu0
  %535 = vmatprep.mubr.f32.mxu0 0.0
  %536 = vmatmul.mubr.f32.gmra.mrb[0].mxu0 %v200
  %v537 = vpop.f32.mrb[0].mxu0
  %v538 = vadd.f32 %v85, %v537
  %v539 = vpop.f32.mrb[0].mxu0
  %540 = vmatprep.mubr.f32.mxu0 0.0
  %541 = vmatmul.mubr.f32.gmra.mrb[0].mxu0 %v203
  %v542 = vpop.f32.mrb[0].mxu0
  %v543 = vadd.f32 %v85, %v542
  %v544 = vpop.f32.mrb[0].mxu0
  %545 = vmatprep.mubr.f32.mxu0 0.0
  %546 = vmatmul.mubr.f32.gmra.mrb[0].mxu0 %v206
  %v547 = vpop.f32.mrb[0].mxu0
  %v548 = vadd.f32 %v85, %v547
  %v549 = vpop.f32.mrb[0].mxu0
  %550 = vmatprep.mubr.f32.mxu0 0.0
  %551 = vmatmul.mubr.f32.gmra.mrb[0].mxu0 %v209
  %v552 = vpop.f32.mrb[0].mxu0
  %v553 = vadd.f32 %v85, %v552
  %v554 = vpop.f32.mrb[0].mxu0
  %555 = vmatprep.mubr.f32.mxu0 0.0
  %556 = vmatmul.mubr.f32.gmra.mrb[0].mxu0 %v212
  %v557 = vpop.f32.mrb[0].mxu0
  %v558 = vadd.f32 %v85, %v557
  %v559 = vpop.f32.mrb[0].mxu0
  %560 = vmatprep.mubr.f32.mxu0 0.0
  %561 = vmatmul.mubr.f32.gmra.mrb[0].mxu0 %v215
  %v562 = vpop.f32.mrb[0].mxu0
  %v563 = vadd.f32 %v85, %v562
  %v564 = vpop.f32.mrb[0].mxu0
  %565 = vmatprep.mubr.f32.mxu0 0.0
  %566 = vmatmul.mubr.f32.gmra.mrb[0].mxu0 %v218
  %v567 = vpop.f32.mrb[0].mxu0
  %v568 = vadd.f32 %v85, %v567
  %v569 = vpop.f32.mrb[0].mxu0
  %570 = vmatprep.mubr.f32.mxu0 0.0
  %571 = vmatmul.mubr.f32.gmra.mrb[0].mxu0 %v221
  %v572 = vpop.f32.mrb[0].mxu0
  %v573 = vadd.f32 %v85, %v572
  %v574 = vpop.f32.mrb[0].mxu0
  %575 = vmatprep.mubr.f32.mxu0 0.0
  %576 = vmatmul.mubr.f32.gmra.mrb[0].mxu0 %v224
  %v577 = vpop.f32.mrb[0].mxu0
  %v578 = vadd.f32 %v85, %v577
  %v579 = vpop.f32.mrb[0].mxu0
  %580 = vmatprep.mubr.f32.mxu0 0.0
  %581 = vmatmul.mubr.f32.gmra.mrb[0].mxu0 %v227
  %v582 = vpop.f32.mrb[0].mxu0
  %v583 = vadd.f32 %v85, %v582
  %v584 = vpop.f32.mrb[0].mxu0
  %585 = vmatprep.mubr.f32.mxu0 0.0
  %586 = vmatmul.mubr.f32.gmra.mrb[0].mxu0 %v230
  %v587 = vpop.f32.mrb[0].mxu0
  %v588 = vadd.f32 %v85, %v587
  %v589 = vpop.f32.mrb[0].mxu0
  %590 = vmatprep.mubr.f32.mxu0 0.0
  %591 = vmatmul.mubr.f32.gmra.mrb[0].mxu0 %v233
  %v592 = vpop.f32.mrb[0].mxu0
  %v593 = vadd.f32 %v85, %v592
  %v594 = vpop.f32.mrb[0].mxu0
  %595 = vmatprep.mubr.f32.mxu0 0.0
  %596 = vmatmul.mubr.f32.gmra.mrb[0].mxu0 %v236
  %v597 = vpop.f32.mrb[0].mxu0
  %v598 = vadd.f32 %v85, %v597
  %v599 = vpop.f32.mrb[0].mxu0
  %600 = vmatprep.mubr.f32.mxu0 0.0
  %601 = vmatmul.mubr.f32.gmra.mrb[0].mxu0 %v239
  %v602 = vpop.f32.mrb[0].mxu0
  %v603 = vadd.f32 %v85, %v602
  %v604 = vpop.f32.mrb[0].mxu0
  %605 = vmatprep.mubr.f32.mxu0 0.0
  %606 = vmatmul.mubr.f32.gmra.mrb[0].mxu0 %v242
  %v607 = vpop.f32.mrb[0].mxu0
  %v608 = vadd.f32 %v85, %v607
  %v609 = vpop.f32.mrb[0].mxu0
  %610 = vmatprep.mubr.f32.mxu0 0.0
  %611 = vmatmul.mubr.f32.gmra.mrb[0].mxu0 %v245
  %v612 = vpop.f32.mrb[0].mxu0
  %v613 = vadd.f32 %v85, %v612
  %v614 = vpop.f32.mrb[0].mxu0
  %615 = vmatprep.mubr.f32.mxu0 0.0
  %616 = vmatmul.mubr.f32.gmra.mrb[0].mxu0 %v248
  %v617 = vpop.f32.mrb[0].mxu0
  %v618 = vadd.f32 %v85, %v617
  %v619 = vpop.f32.mrb[0].mxu0
  %620 = vmatprep.mubr.f32.mxu0 0.0
  %621 = vmatmul.mubr.f32.gmra.mrb[0].mxu0 %v251
  %v622 = vpop.f32.mrb[0].mxu0
  %v623 = vadd.f32 %v85, %v622
  %v624 = vpop.f32.mrb[0].mxu0
  %625 = vmatprep.mubr.f32.mxu0 0.0
  %626 = vmatmul.mubr.f32.gmra.mrb[0].mxu0 %v254
  %v627 = vpop.f32.mrb[0].mxu0
  %v628 = vadd.f32 %v85, %v627
  %v629 = vpop.f32.mrb[0].mxu0
  %630 = vmatprep.mubr.f32.mxu0 0.0
  %631 = vmatmul.mubr.f32.gmra.mrb[0].mxu0 %v257
  %v632 = vpop.f32.mrb[0].mxu0
  %v633 = vadd.f32 %v85, %v632
  %v634 = vpop.f32.mrb[0].mxu0
  %635 = vmatprep.mubr.f32.mxu0 0.0
  %636 = vmatmul.mubr.f32.gmra.mrb[0].mxu0 %v260
  %v637 = vpop.f32.mrb[0].mxu0
  %v638 = vadd.f32 %v85, %v637
  %v639 = vpop.f32.mrb[0].mxu0
  %640 = vmatprep.mubr.f32.mxu0 0.0
  %641 = vmatmul.mubr.f32.gmra.mrb[0].mxu0 %v263
  %v642 = vpop.f32.mrb[0].mxu0
  %v643 = vadd.f32 %v85, %v642
  %v644 = vpop.f32.mrb[0].mxu0
  %645 = vmatprep.mubr.f32.mxu0 0.0
  %646 = vmatmul.mubr.f32.gmra.mrb[0].mxu0 %v266
  %v647 = vpop.f32.mrb[0].mxu0
  %v648 = vadd.f32 %v85, %v647
  %v649 = vpop.f32.mrb[0].mxu0
  %650 = vmatprep.mubr.f32.mxu0 0.0
  %651 = vmatmul.mubr.f32.gmra.mrb[0].mxu0 %v269
  %v652 = vpop.f32.mrb[0].mxu0
  %v653 = vadd.f32 %v85, %v652
  %v654 = vpop.f32.mrb[0].mxu0
  %655 = vmatprep.mubr.f32.mxu0 0.0
  %656 = vmatmul.mubr.f32.gmra.mrb[0].mxu0 %v272
  %v657 = vpop.f32.mrb[0].mxu0
  %v658 = vadd.f32 %v85, %v657
  %v659 = vpop.f32.mrb[0].mxu0
  %660 = vmatprep.mubr.f32.mxu0 0.0
  %661 = vmatmul.mubr.f32.gmra.mrb[0].mxu0 %v275
  %v662 = vpop.f32.mrb[0].mxu0
  %v663 = vadd.f32 %v85, %v662
  %v664 = vpop.f32.mrb[0].mxu0
  %665 = vmatprep.mubr.f32.mxu0 0.0
  %666 = vmatmul.mubr.f32.gmra.mrb[0].mxu0 %v278
  %v667 = vpop.f32.mrb[0].mxu0
  %v668 = vadd.f32 %v85, %v667
  %v669 = vpop.f32.mrb[0].mxu0
  %670 = vdwg.mxu0
  %vm671 = vcmask 130048
  %672 = vst.msk [vmem:[%s3] sm:$0xff] %vm671, %v353
  %673 = vst.msk [vmem:[%s3 + $0x8] sm:$0xff] %vm671, %v358
  %674 = vst.msk [vmem:[%s3 + $0x10] sm:$0xff] %vm671, %v363
  %675 = vst.msk [vmem:[%s3 + $0x18] sm:$0xff] %vm671, %v368
  %676 = vst.msk [vmem:[%s3 + $0x20] sm:$0xff] %vm671, %v373
  %677 = vst.msk [vmem:[%s3 + $0x28] sm:$0xff] %vm671, %v378
  %678 = vst.msk [vmem:[%s3 + $0x30] sm:$0xff] %vm671, %v383
  %679 = vst.msk [vmem:[%s3 + $0x38] sm:$0xff] %vm671, %v388
  %680 = vst.msk [vmem:[%s3 + $0x40] sm:$0xff] %vm671, %v393
  %681 = vst.msk [vmem:[%s3 + $0x48] sm:$0xff] %vm671, %v398
  %682 = vst.msk [vmem:[%s3 + $0x50] sm:$0xff] %vm671, %v403
  %683 = vst.msk [vmem:[%s3 + $0x58] sm:$0xff] %vm671, %v408
  %684 = vst.msk [vmem:[%s3 + $0x60] sm:$0xff] %vm671, %v413
  %685 = vst.msk [vmem:[%s3 + $0x68] sm:$0xff] %vm671, %v418
  %686 = vst.msk [vmem:[%s3 + $0x70] sm:$0xff] %vm671, %v423
  %687 = vst.msk [vmem:[%s3 + $0x78] sm:$0xff] %vm671, %v428
  %688 = vst.msk [vmem:[%s3 + $0x80] sm:$0xff] %vm671, %v433
  %689 = vst.msk [vmem:[%s3 + $0x88] sm:$0xff] %vm671, %v438
  %690 = vst.msk [vmem:[%s3 + $0x90] sm:$0xff] %vm671, %v443
  %691 = vst.msk [vmem:[%s3 + $0x98] sm:$0xff] %vm671, %v448
  %692 = vst.msk [vmem:[%s3 + $0xa0] sm:$0xff] %vm671, %v453
  %693 = vst.msk [vmem:[%s3 + $0xa8] sm:$0xff] %vm671, %v458
  %694 = vst.msk [vmem:[%s3 + $0xb0] sm:$0xff] %vm671, %v463
  %695 = vst.msk [vmem:[%s3 + $0xb8] sm:$0xff] %vm671, %v468
  %696 = vst.msk [vmem:[%s3 + $0xc0] sm:$0xff] %vm671, %v473
  %697 = vst.msk [vmem:[%s3 + $0xc8] sm:$0xff] %vm671, %v478
  %698 = vst.msk [vmem:[%s3 + $0xd0] sm:$0xff] %vm671, %v483
  %699 = vst.msk [vmem:[%s3 + $0xd8] sm:$0xff] %vm671, %v488
  %700 = vst.msk [vmem:[%s3 + $0xe0] sm:$0xff] %vm671, %v493
  %701 = vst.msk [vmem:[%s3 + $0xe8] sm:$0xff] %vm671, %v498
  %702 = vst.msk [vmem:[%s3 + $0xf0] sm:$0xff] %vm671, %v503
  %703 = vst.msk [vmem:[%s3 + $0xf8] sm:$0xff] %vm671, %v508
  %704 = vst.msk [vmem:[%s3 + $0x100] sm:$0xff] %vm671, %v513
  %705 = vst.msk [vmem:[%s3 + $0x108] sm:$0xff] %vm671, %v518
  %706 = vst.msk [vmem:[%s3 + $0x110] sm:$0xff] %vm671, %v523
  %707 = vst.msk [vmem:[%s3 + $0x118] sm:$0xff] %vm671, %v528
  %708 = vst.msk [vmem:[%s3 + $0x120] sm:$0xff] %vm671, %v533
  %709 = vst.msk [vmem:[%s3 + $0x128] sm:$0xff] %vm671, %v538
  %710 = vst.msk [vmem:[%s3 + $0x130] sm:$0xff] %vm671, %v543
  %711 = vst.msk [vmem:[%s3 + $0x138] sm:$0xff] %vm671, %v548
  %712 = vst.msk [vmem:[%s3 + $0x140] sm:$0xff] %vm671, %v553
  %713 = vst.msk [vmem:[%s3 + $0x148] sm:$0xff] %vm671, %v558
  %714 = vst.msk [vmem:[%s3 + $0x150] sm:$0xff] %vm671, %v563
  %715 = vst.msk [vmem:[%s3 + $0x158] sm:$0xff] %vm671, %v568
  %716 = vst.msk [vmem:[%s3 + $0x160] sm:$0xff] %vm671, %v573
  %717 = vst.msk [vmem:[%s3 + $0x168] sm:$0xff] %vm671, %v578
  %718 = vst.msk [vmem:[%s3 + $0x170] sm:$0xff] %vm671, %v583
  %719 = vst.msk [vmem:[%s3 + $0x178] sm:$0xff] %vm671, %v588
  %720 = vst.msk [vmem:[%s3 + $0x180] sm:$0xff] %vm671, %v593
  %721 = vst.msk [vmem:[%s3 + $0x188] sm:$0xff] %vm671, %v598
  %722 = vst.msk [vmem:[%s3 + $0x190] sm:$0xff] %vm671, %v603
  %723 = vst.msk [vmem:[%s3 + $0x198] sm:$0xff] %vm671, %v608
  %724 = vst.msk [vmem:[%s3 + $0x1a0] sm:$0xff] %vm671, %v613
  %725 = vst.msk [vmem:[%s3 + $0x1a8] sm:$0xff] %vm671, %v618
  %726 = vst.msk [vmem:[%s3 + $0x1b0] sm:$0xff] %vm671, %v623
  %727 = vst.msk [vmem:[%s3 + $0x1b8] sm:$0xff] %vm671, %v628
  %728 = vst.msk [vmem:[%s3 + $0x1c0] sm:$0xff] %vm671, %v633
  %729 = vst.msk [vmem:[%s3 + $0x1c8] sm:$0xff] %vm671, %v638
  %730 = vst.msk [vmem:[%s3 + $0x1d0] sm:$0xff] %vm671, %v643
  %731 = vst.msk [vmem:[%s3 + $0x1d8] sm:$0xff] %vm671, %v648
  %732 = vst.msk [vmem:[%s3 + $0x1e0] sm:$0xff] %vm671, %v653
  %733 = vst.msk [vmem:[%s3 + $0x1e8] sm:$0xff] %vm671, %v658
  %734 = vst.msk [vmem:[%s3 + $0x1f0] sm:$0xff] %vm671, %v663
  %735 = vst.msk [vmem:[%s3 + $0x1f8] sm:$0xff] %vm671, %v668
  // Predicated region
  $region14: #{tpu_custom_call.1} parent=0 // pred_check
    _
  $region15: #{tpu_custom_call.1} parent=0 // pred_check_branch
    %737 = sbr.rel (0) target = $region17
  $region16: #{tpu_custom_call.1} parent=0 // pred_region
    _
  $region17: #{tpu_custom_call.1} parent=0 // pred_fallthru
    _
  // Predicated region
  $region18: #{tpu_custom_call.1} parent=0 // pred_check
    _
  $region19: #{tpu_custom_call.1} parent=0 // pred_check_branch
    %739 = sbr.rel (0) target = $region21
  $region20: #{tpu_custom_call.1} parent=0 // pred_region
    _
  $region21: #{tpu_custom_call.1} parent=0 // pred_fallthru
    _

</llo_original>
